<compile_context>
chip_gen: v5e
topology: v5e:2x2
jax: 0.10.0
libtpu: 0.0.40
codegen_flags: <defaults>
</compile_context>

<pallas_src>
import jax
import jax.numpy as jnp
from jax.experimental import pallas as pl
from jax.experimental.pallas import tpu as pltpu

_LANE = 128                              # vreg lane width
_TARGET_BLOCK_BYTES = 2 * 1024 * 1024    # ~2 MiB/block -> 4 buffers ~8 MiB VMEM
_LANE_CAP = 16384                        # widest lane dim we bother with


def _copy_kernel(x_ref, o_ref):
    # Identity pass over one VMEM-resident tile.
    o_ref[...] = x_ref[...]


def _sublane(itemsize: int) -> int:
    # Native packing: (8,128) f32, (16,128) bf16, (32,128) int8/fp8.
    return max(8, 32 // itemsize)


def _choose_layout(n: int, itemsize: int):
    """Pick (rows, lanes, block_rows) for a lane-dense 2D view of n elements.

    `n` must be a multiple of 128.  `lanes` is the largest multiple of 128
    that divides n (capped), so the output is lane-dense (unmasked stores).
    `block_rows` is the largest multiple of the dtype's sublane count that
    keeps one block near _TARGET_BLOCK_BYTES.
    """
    sub = _sublane(itemsize)
    m = n // _LANE
    d = 1
    for cand in range(min(_LANE_CAP // _LANE, m), 0, -1):   # trace-time loop
        if m % cand == 0:
            d = cand
            break
    lanes = d * _LANE
    rows = n // lanes

    br = (_TARGET_BLOCK_BYTES // itemsize // lanes) // sub * sub
    br = max(sub, br)
    if br >= rows:
        br = rows            # full extent along rows -> always a legal block dim
    return rows, lanes, br


def _pallas_copy_2d(flat):
    """Identity copy of a 128-aligned 1D array through a tiled Pallas kernel."""
    n = flat.size
    itemsize = jnp.dtype(flat.dtype).itemsize
    rows, lanes, br = _choose_layout(n, itemsize)
    x2d = jnp.reshape(flat, (rows, lanes))          # metadata-only

    out2d = pl.pallas_call(
        _copy_kernel,
        out_shape=jax.ShapeDtypeStruct((rows, lanes), flat.dtype),
        grid=(pl.cdiv(rows, br),),
        in_specs=[pl.BlockSpec((br, lanes), lambda i: (i, 0))],
        out_specs=pl.BlockSpec((br, lanes), lambda i: (i, 0)),
        compiler_params=pltpu.CompilerParams(
            dimension_semantics=("parallel",)),     # shards across 2 TCs on v7x
    )(x2d)
    return jnp.reshape(out2d, (-1,))                # metadata-only


def reshape_pallas(x, shape):
    """Equivalent of torch `x.view(shape)`; data movement done in Pallas."""
    flat = jnp.reshape(x, (-1,))                    # row-major flatten == .view order
    n = flat.size
    if n == 0:
        return jnp.reshape(flat, shape)

    n_main = (n // _LANE) * _LANE
    if n_main == 0:
        # Fewer than 128 elements: no legal TPU tile; metadata-only reshape.
        return jnp.reshape(flat, shape)

    if n_main == n:
        out_flat = _pallas_copy_2d(flat)
    else:
        # Ragged (<128-element) tail: aligned prefix through the kernel, tiny
        # tail appended in plain JAX.
        # TODO(synk): this rare path materializes the output once more via
        # concatenate; only hit when numel is not a multiple of 128.
        out_flat = jnp.concatenate(
            [_pallas_copy_2d(flat[:n_main]), flat[n_main:]])

    # Final shape reinterpretation (supports -1, like torch.view).
    return jnp.reshape(out_flat, shape)


class Reshape:
    """Mirror of the PyTorch module: stores a target shape, applies it in forward."""

    def __init__(self, *args):
        self.shape = args

    def __call__(self, x):
        return reshape_pallas(x, self.shape)


if __name__ == "__main__":
    key = jax.random.PRNGKey(0)
    # Small NCHW-style input: (batch=2, channels=4, H=16, W=16).
    x = jax.random.normal(key, (2, 4, 16, 16), dtype=jnp.float32)

    # Typical usage: Reshape(batch, -1) before a linear head.
    module = Reshape(2, -1)
    y = module(x)
    y = jax.block_until_ready(y)

    # Reference: pure-JAX reshape (same semantics as torch .view on contiguous x).
    y_ref = jnp.reshape(x, (2, -1))
    assert y.shape == (2, 4 * 16 * 16), y.shape
    assert y.dtype == x.dtype
    assert bool(jnp.all(y == y_ref))

    print("KERNEL_OK")
</pallas_src>

<mosaic_0001>
module attributes {stable_mosaic.version = 11 : i64} {
  func.func @_copy_kernel(%arg0: i32, %arg1: memref<1x2048xf32, #tpu.memory_space<vmem>>, %arg2: memref<1x2048xf32, #tpu.memory_space<vmem>>) attributes {dimension_semantics = [#tpu.dimension_semantics<parallel>], iteration_bounds = array<i64: 1>, scalar_prefetch = 0 : i64, scratch_operands = 0 : i64, tpu.core_type = #tpu.core_type<tc>, window_params = [{transform_indices = @transform_0, window_bounds = array<i64: 1, 2048>}, {transform_indices = @transform_1, window_bounds = array<i64: 1, 2048>}]} {
    %c0 = arith.constant 0 : index
    %c0_0 = arith.constant 0 : index
    %0 = vector.load %arg1[%c0, %c0_0] : memref<1x2048xf32, #tpu.memory_space<vmem>>, vector<1x2048xf32>
    %c0_1 = arith.constant 0 : index
    %c0_2 = arith.constant 0 : index
    %1 = vector.load %arg2[%c0_1, %c0_2] : memref<1x2048xf32, #tpu.memory_space<vmem>>, vector<1x2048xf32>
    tpu.vector_store %arg2[%c0_1, %c0_2], %0 {strides = array<i32>} : memref<1x2048xf32, #tpu.memory_space<vmem>>, vector<1x2048xf32>,
    return
  }
  func.func @transform_0(%arg0: i32) -> (i32, i32) {
    %c0_i32 = arith.constant 0 : i32
    %c0_i32_0 = arith.constant 0 : i32
    return %arg0, %c0_i32 : i32, i32
  }
  func.func @transform_1(%arg0: i32) -> (i32, i32) {
    %c0_i32 = arith.constant 0 : i32
    %c0_i32_0 = arith.constant 0 : i32
    return %arg0, %c0_i32 : i32, i32
  }
}

</mosaic_0001>

<llo_original>
// kernel: tpu_custom_call.1
$region0: #{tpu_custom_call.1}
  #allocation0 [shape = 'u32[]', space=smem, size = 0x4, offset = 0x4, fixed_abs, tag = 'smem constant byte address 0x4 - core index']
  #allocation1 [shape = 'u32[72,128]{1,0:T(1,128)}', space=vmem, size = 0x9000, scoped, tag = 'internal scratch']
  %s0 = inlined_call_operand.hbm [shape: f32[1,2048], index: 0, kind: input, shape index: {}]
  %s1 = inlined_call_operand.hbm [shape: f32[1,2048], index: 1, kind: output, shape index: {}]
  %s2 = sld [smem:[#allocation0]]
  $region18: #{tpu_custom_call.1} parent=0
    _
  %s4 = ssub.s32 1, %s2
  %s5 = scalar_select 0, %s4, %s2
  $region1: #{tpu_custom_call.1} parent=0
    #allocation2 [shape = 'u8[8192]{0}', space=vmem, size = 0x2000, scoped, tag = 'input window, operand 0, single buffered']
    #allocation3 [shape = 's32[1]{0}', space=sflag, size = 0x4, scoped, tag = 'scoped memory for tpu_custom_call.1']
    #allocation4 [shape = 's32[1]{0}', space=sflag, size = 0x4, scoped, tag = 'scoped memory for tpu_custom_call.1']
    #allocation5 [shape = 'u8[8192]{0}', space=vmem, size = 0x2000, scoped, tag = 'output window, operand 0, single buffered']
    %6 = vsyncpa [#allocation3], 0
    %7 = vsyncpa [#allocation4], 0
    // Predicated region
    $region2: #{tpu_custom_call.1} parent=1 // pred_check
      _
    $region3: #{tpu_custom_call.1} parent=1 // pred_check_branch
      %9 = sbr.rel (0) target = $region5
    $region4: #{tpu_custom_call.1} parent=1 // pred_region
      %11 = vsyncadd [#allocation3], 0
      %s13 = sshll.u32 %s0, 4
      %s14 = int_to_ptr.hbm [resolvable:$true] %s13
      %s15 = sshll.u32 [#allocation2], 4
      %s16 = int_to_ptr.vmem [resolvable:$true] %s15
      %18 = dma.hbm_to_vmem [thread:$0]  %s14, 256, %s16, [#allocation3]
    $region5: #{tpu_custom_call.1} parent=1 // pred_fallthru
      _
    // Predicated region
    $region6: #{tpu_custom_call.1} parent=1 // pred_check
      _
    $region7: #{tpu_custom_call.1} parent=1 // pred_check_branch
      %20 = sbr.rel (0) target = $region9
    $region8: #{tpu_custom_call.1} parent=1 // pred_region
      %22 = dma.done [#allocation3], 256
    $region9: #{tpu_custom_call.1} parent=1 // pred_fallthru
      _
    %v23 = vld [vmem:[#allocation2] sm:$0xff]
    %v24 = vld [vmem:[#allocation2 + $0x8] sm:$0xff]
    %25 = vst [vmem:[#allocation5] sm:$0xff] %v23
    %26 = vst [vmem:[#allocation5 + $0x8] sm:$0xff] %v24
    // Predicated region
    $region10: #{tpu_custom_call.1} parent=1 // pred_check
      _
    $region11: #{tpu_custom_call.1} parent=1 // pred_check_branch
      %28 = sbr.rel (0) target = $region13
    $region12: #{tpu_custom_call.1} parent=1 // pred_region
      %30 = vsyncadd [#allocation4], 0
      %s32 = sshll.u32 [#allocation5], 4
      %s33 = int_to_ptr.vmem [resolvable:$true] %s32
      %s34 = sshll.u32 %s1, 4
      %s35 = int_to_ptr.hbm [resolvable:$true] %s34
      %37 = dma.vmem_to_hbm [thread:$0]  %s33, 256, %s35, [#allocation4]
    $region13: #{tpu_custom_call.1} parent=1 // pred_fallthru
      _
    // Predicated region
    $region14: #{tpu_custom_call.1} parent=1 // pred_check
      _
    $region15: #{tpu_custom_call.1} parent=1 // pred_check_branch
      %39 = sbr.rel (0) target = $region17
    $region16: #{tpu_custom_call.1} parent=1 // pred_region
      %41 = dma.done [#allocation4], 256
    $region17: #{tpu_custom_call.1} parent=1 // pred_fallthru
      _
    %42 = vsyncpa [#allocation3], 1
    %43 = vsyncpa [#allocation4], 1

</llo_original>
